<compile_context>
chip_gen: v6e
topology: v6e:2x2x1
jax: 0.10.0
libtpu: 0.0.40
codegen_flags: <defaults>
</compile_context>

<pallas_src>
import jax
import jax.numpy as jnp
from jax.experimental import pallas as pl
from jax.experimental.pallas import tpu as pltpu

_LANE = 128
_SUBLANE = 8


def _round_up(x, m):
    return (x + m - 1) // m * m


def ffn_kernel(x_ref, w1j_ref, b1j_ref, w2_ref, b2_ref, w3_ref, b3_ref, o_ref):
    w_dtype = w1j_ref.dtype
    hid = w2_ref.shape[0]                    # padded hidden width (static int)

    x = x_ref[...].astype(w_dtype)

    # Fused first-layer + jump matmul: one MXU pass over x.
    hj = jnp.dot(x, w1j_ref[...], preferred_element_type=jnp.float32)
    hj = hj + b1j_ref[...]
    h = jnp.maximum(hj[:, :hid], 0.0)        # block path, post-ReLU
    j = hj[:, hid:]                          # jumping connection (no ReLU)

    h = jnp.dot(h.astype(w_dtype), w2_ref[...],
                preferred_element_type=jnp.float32) + b2_ref[...]
    h = jnp.maximum(h, 0.0)
    h = jnp.dot(h.astype(w_dtype), w3_ref[...],
                preferred_element_type=jnp.float32) + b3_ref[...]
    h = jnp.maximum(h, 0.0)

    o_ref[...] = (h + j).astype(o_ref.dtype)


def prepare_params(params, *, dtype=None):
    """One-time prep: zero-pad hidden dims to 128-lane multiples, fuse w1/wj.

    `params` holds [in, out] weights (PyTorch weight.T) and (1, out) biases.
    The contraction dim (in_dim) is deliberately NOT padded, so x is consumed
    unpadded. `dtype=jnp.bfloat16` enables the bf16 MXU fast path on v6e/v7x
    (accumulation stays f32).
    """
    in_dim, hid_dim = params["w1"].shape
    hid_p = _round_up(hid_dim, _LANE)

    def cast(a):
        return a if dtype is None else a.astype(dtype)

    def pad_cols(a, cols):
        return cast(jnp.pad(a, ((0, 0), (0, cols - a.shape[1]))))

    def pad_both(a, rows, cols):
        return cast(jnp.pad(a, ((0, rows - a.shape[0]),
                                (0, cols - a.shape[1]))))

    w1 = pad_cols(params["w1"], hid_p)            # [in_dim, hid_p]
    wj = pad_cols(params["wj"], hid_p)            # [in_dim, hid_p]
    b1 = pad_cols(params["b1"], hid_p)            # [1, hid_p]
    bj = pad_cols(params["bj"], hid_p)            # [1, hid_p]
    return dict(
        w1j=jnp.concatenate([w1, wj], axis=1),    # [in_dim, 2*hid_p]
        b1j=jnp.concatenate([b1, bj], axis=1),    # [1, 2*hid_p]
        w2=pad_both(params["w2"], hid_p, hid_p),
        b2=pad_cols(params["b2"], hid_p),
        w3=pad_both(params["w3"], hid_p, hid_p),
        b3=pad_cols(params["b3"], hid_p),
        in_dim=in_dim, hid_dim=hid_dim, hid_p=hid_p,
    )


def _vmem_capacity_budget():
    """~85% of this generation's per-core VMEM (leave compiler headroom)."""
    try:
        cap = pltpu.get_tpu_info().vmem_capacity_bytes
    except Exception:
        cap = 64 << 20          # conservative fallback: v7x per-TC VMEM
    return int(cap * 0.85)


def feedforward_network(x, prep, *, tile_n=1024, trim=True):
    """x: [N, in_dim]. prep: output of prepare_params.

    Returns [N, hid_dim] (trim=True, module semantics) or the lane-padded
    [N, hid_p] array whose extra columns are exactly zero (trim=False; avoids
    an extra HBM copy when the consumer slices lazily / fuses).
    """
    N, in_dim = x.shape
    assert in_dim == prep["in_dim"]
    hid_p, hid_dim = prep["hid_p"], prep["hid_dim"]
    w_dtype = prep["w1j"].dtype

    # Sublane packing of the compute dtype: 8 (f32) / 16 (bf16) / 32 (int8).
    pack = max(_SUBLANE, 32 // jnp.dtype(w_dtype).itemsize)
    # Big tiles amortize per-step overhead and MXU RHS holds, but keep >= 2
    # grid steps so the "parallel" row axis can shard across v7x's two TCs.
    tile_n = max(pack, min(_round_up(tile_n, pack),
                           _round_up(pl.cdiv(N, 2), pack)))
    grid = (pl.cdiv(N, tile_n),)

    itemsize_w = jnp.dtype(w_dtype).itemsize
    itemsize_x = jnp.dtype(x.dtype).itemsize
    weight_bytes = (in_dim * 2 * hid_p + 2 * hid_p * hid_p + 4 * hid_p) * itemsize_w

    cost = pl.CostEstimate(
        flops=2 * N * (in_dim * 2 * hid_p + 2 * hid_p * hid_p),
        transcendentals=0,
        bytes_accessed=N * in_dim * itemsize_x + N * hid_p * itemsize_x
        + weight_bytes,
    )

    vmem_cap_budget = _vmem_capacity_budget()

    def _vmem_budget(single_buffer_weights):
        w_buf = 1 if single_buffer_weights else 2
        tile_bytes = 2 * tile_n * (in_dim * itemsize_x + hid_p * itemsize_x)
        scratch_bytes = 3 * tile_n * hid_p * 4          # f32 hj + h intermediates
        est = w_buf * weight_bytes + tile_bytes + scratch_bytes + (4 << 20)
        return int(min(max(est, 8 << 20), vmem_cap_budget))

    def _build(single_buffer_weights):
        def wspec(shape):
            if single_buffer_weights:
                # Constant index_map => never re-fetched; single buffer halves
                # the weights' VMEM residency (decisive under v7x's 64 MiB).
                return pl.BlockSpec(shape, lambda i: (0, 0),
                                    pipeline_mode=pl.Buffered(1))
            return pl.BlockSpec(shape, lambda i: (0, 0))

        return pl.pallas_call(
            ffn_kernel,
            out_shape=jax.ShapeDtypeStruct((N, hid_p), x.dtype),
            grid_spec=pltpu.PrefetchScalarGridSpec(
                num_scalar_prefetch=0,
                grid=grid,
                in_specs=[
                    pl.BlockSpec((tile_n, in_dim), lambda i: (i, 0)),  # x tile
                    wspec((in_dim, 2 * hid_p)),                        # [w1|wj]
                    wspec((1, 2 * hid_p)),                             # [b1|bj]
                    wspec((hid_p, hid_p)),                             # w2
                    wspec((1, hid_p)),                                 # b2
                    wspec((hid_p, hid_p)),                             # w3
                    wspec((1, hid_p)),                                 # b3
                ],
                out_specs=pl.BlockSpec((tile_n, hid_p), lambda i: (i, 0)),
            ),
            compiler_params=pltpu.CompilerParams(
                dimension_semantics=("parallel",),
                vmem_limit_bytes=_vmem_budget(single_buffer_weights),
            ),
            cost_estimate=cost,
        )

    args = (x, prep["w1j"], prep["b1j"], prep["w2"], prep["b2"],
            prep["w3"], prep["b3"])
    try:
        out = _build(True)(*args)
    except Exception:
        # pipeline_mode=pl.Buffered(1) not supported by this jax/Mosaic build;
        # fall back to default double-buffered weight specs.
        out = _build(False)(*args)

    if trim and hid_dim != hid_p:
        return out[:, :hid_dim]
    return out


def init_params(key, in_dim, hid_dim, dtype=jnp.float32):
    """Deterministic init. Weights stored as [in, out] (transposed vs PyTorch)."""
    ks = jax.random.split(key, 8)

    def lin(kw, kb, fan_in, fan_out):
        bound = 1.0 / jnp.sqrt(fan_in)
        w = jax.random.uniform(kw, (fan_in, fan_out), dtype, -bound, bound)
        b = jax.random.uniform(kb, (1, fan_out), dtype, -bound, bound)
        return w, b

    w1, b1 = lin(ks[0], ks[1], in_dim, hid_dim)
    w2, b2 = lin(ks[2], ks[3], hid_dim, hid_dim)
    w3, b3 = lin(ks[4], ks[5], hid_dim, hid_dim)
    wj, bj = lin(ks[6], ks[7], in_dim, hid_dim)
    return dict(w1=w1, b1=b1, w2=w2, b2=b2, w3=w3, b3=b3, wj=wj, bj=bj)


def reference(x, p):
    h = jnp.maximum(x @ p["w1"] + p["b1"], 0.0)
    h = jnp.maximum(h @ p["w2"] + p["b2"], 0.0)
    h = jnp.maximum(h @ p["w3"] + p["b3"], 0.0)
    return h + (x @ p["wj"] + p["bj"])


if __name__ == "__main__":
    key = jax.random.PRNGKey(0)
    k_x, k_p, k_x2 = jax.random.split(key, 3)

    # Small shapes consistent with the module: N=8 rows, in_dim=16, hid_dim=32.
    N, in_dim, hid_dim = 8, 16, 32
    params = init_params(k_p, in_dim, hid_dim)
    prep = prepare_params(params)

    x = jax.random.normal(k_x, (N, in_dim), jnp.float32)
    out = jax.block_until_ready(feedforward_network(x, prep))
    ref = reference(x, params)
    assert out.shape == (N, hid_dim)
    assert jnp.allclose(out, ref, atol=1e-5, rtol=1e-5), "mismatch vs reference"

    # Second check: ragged N with a multi-step grid (exercises masked ragged
    # tiles, megacore-friendly tile split, and the un-trimmed fast-path output
    # whose padded columns must be exactly zero).
    N2 = 300
    x2 = jax.random.normal(k_x2, (N2, in_dim), jnp.float32)
    out2_full = jax.block_until_ready(
        feedforward_network(x2, prep, tile_n=1024, trim=False))
    ref2 = reference(x2, params)
    assert out2_full.shape == (N2, prep["hid_p"])
    assert jnp.allclose(out2_full[:, :hid_dim], ref2, atol=1e-5, rtol=1e-5), \
        "mismatch (ragged N)"
    assert bool(jnp.all(out2_full[:, hid_dim:] == 0.0)), \
        "padded output columns must be exactly zero"

    print("KERNEL_OK")
</pallas_src>

<mosaic_0001>
module attributes {stable_mosaic.version = 11 : i64} {
  func.func @ffn_kernel(%arg0: i32, %arg1: memref<8x16xf32, #tpu.memory_space<vmem>>, %arg2: memref<16x256xf32, #tpu.memory_space<vmem>>, %arg3: memref<1x256xf32, #tpu.memory_space<vmem>>, %arg4: memref<128x128xf32, #tpu.memory_space<vmem>>, %arg5: memref<1x128xf32, #tpu.memory_space<vmem>>, %arg6: memref<128x128xf32, #tpu.memory_space<vmem>>, %arg7: memref<1x128xf32, #tpu.memory_space<vmem>>, %arg8: memref<8x128xf32, #tpu.memory_space<vmem>>) attributes {dimension_semantics = [#tpu.dimension_semantics<parallel>], iteration_bounds = array<i64: 1>, scalar_prefetch = 0 : i64, scratch_operands = 0 : i64, tpu.core_type = #tpu.core_type<tc>, window_params = [{transform_indices = @transform_0, window_bounds = array<i64: 8, 16>}, {pipeline_mode = #tpu.pipeline_mode<synchronous>, transform_indices = @transform_1, window_bounds = array<i64: 16, 256>}, {pipeline_mode = #tpu.pipeline_mode<synchronous>, transform_indices = @transform_2, window_bounds = array<i64: 1, 256>}, {pipeline_mode = #tpu.pipeline_mode<synchronous>, transform_indices = @transform_3, window_bounds = array<i64: 128, 128>}, {pipeline_mode = #tpu.pipeline_mode<synchronous>, transform_indices = @transform_4, window_bounds = array<i64: 1, 128>}, {pipeline_mode = #tpu.pipeline_mode<synchronous>, transform_indices = @transform_5, window_bounds = array<i64: 128, 128>}, {pipeline_mode = #tpu.pipeline_mode<synchronous>, transform_indices = @transform_6, window_bounds = array<i64: 1, 128>}, {transform_indices = @transform_7, window_bounds = array<i64: 8, 128>}]} {
    %c0 = arith.constant 0 : index
    %c0_0 = arith.constant 0 : index
    %0 = vector.load %arg1[%c0, %c0_0] : memref<8x16xf32, #tpu.memory_space<vmem>>, vector<8x16xf32>
    %c0_1 = arith.constant 0 : index
    %c0_2 = arith.constant 0 : index
    %1 = vector.load %arg2[%c0_1, %c0_2] : memref<16x256xf32, #tpu.memory_space<vmem>>, vector<16x256xf32>
    %cst = arith.constant dense<0.000000e+00> : vector<8x256xf32>
    %2 = tpu.matmul %0, %1, %cst {dimension_numbers = #tpu.dot_dimension_numbers<[1], [0], [0], [1], [0, 0, 1, 1], [], []>} : vector<8x16xf32>, vector<16x256xf32>, vector<8x256xf32> -> vector<8x256xf32>
    %c0_3 = arith.constant 0 : index
    %c0_4 = arith.constant 0 : index
    %3 = vector.load %arg3[%c0_3, %c0_4] : memref<1x256xf32, #tpu.memory_space<vmem>>, vector<1x256xf32>
    %4 = vector.broadcast %3 : vector<1x256xf32> to vector<8x256xf32>
    %5 = arith.addf %2, %4 : vector<8x256xf32>
    %6 = vector.extract_strided_slice %5 {offsets = [0, 0], sizes = [8, 128], strides = [1, 1]} : vector<8x256xf32> to vector<8x128xf32>
    %cst_5 = arith.constant 0.000000e+00 : f32
    %7 = vector.broadcast %cst_5 : f32 to vector<8x128xf32>
    %8 = arith.maximumf %6, %7 : vector<8x128xf32>
    %9 = vector.extract_strided_slice %5 {offsets = [0, 128], sizes = [8, 128], strides = [1, 1]} : vector<8x256xf32> to vector<8x128xf32>
    %c0_6 = arith.constant 0 : index
    %c0_7 = arith.constant 0 : index
    %10 = vector.load %arg4[%c0_6, %c0_7] : memref<128x128xf32, #tpu.memory_space<vmem>>, vector<128x128xf32>
    %cst_8 = arith.constant dense<0.000000e+00> : vector<8x128xf32>
    %11 = tpu.matmul %8, %10, %cst_8 {dimension_numbers = #tpu.dot_dimension_numbers<[1], [0], [0], [1], [0, 0, 1, 1], [], []>} : vector<8x128xf32>, vector<128x128xf32>, vector<8x128xf32> -> vector<8x128xf32>
    %c0_9 = arith.constant 0 : index
    %c0_10 = arith.constant 0 : index
    %12 = vector.load %arg5[%c0_9, %c0_10] : memref<1x128xf32, #tpu.memory_space<vmem>>, vector<1x128xf32>
    %13 = vector.broadcast %12 : vector<1x128xf32> to vector<8x128xf32>
    %14 = arith.addf %11, %13 : vector<8x128xf32>
    %cst_11 = arith.constant 0.000000e+00 : f32
    %15 = vector.broadcast %cst_11 : f32 to vector<8x128xf32>
    %16 = arith.maximumf %14, %15 : vector<8x128xf32>
    %c0_12 = arith.constant 0 : index
    %c0_13 = arith.constant 0 : index
    %17 = vector.load %arg6[%c0_12, %c0_13] : memref<128x128xf32, #tpu.memory_space<vmem>>, vector<128x128xf32>
    %cst_14 = arith.constant dense<0.000000e+00> : vector<8x128xf32>
    %18 = tpu.matmul %16, %17, %cst_14 {dimension_numbers = #tpu.dot_dimension_numbers<[1], [0], [0], [1], [0, 0, 1, 1], [], []>} : vector<8x128xf32>, vector<128x128xf32>, vector<8x128xf32> -> vector<8x128xf32>
    %c0_15 = arith.constant 0 : index
    %c0_16 = arith.constant 0 : index
    %19 = vector.load %arg7[%c0_15, %c0_16] : memref<1x128xf32, #tpu.memory_space<vmem>>, vector<1x128xf32>
    %20 = vector.broadcast %19 : vector<1x128xf32> to vector<8x128xf32>
    %21 = arith.addf %18, %20 : vector<8x128xf32>
    %cst_17 = arith.constant 0.000000e+00 : f32
    %22 = vector.broadcast %cst_17 : f32 to vector<8x128xf32>
    %23 = arith.maximumf %21, %22 : vector<8x128xf32>
    %24 = arith.addf %23, %9 : vector<8x128xf32>
    %c0_18 = arith.constant 0 : index
    %c0_19 = arith.constant 0 : index
    %25 = vector.load %arg8[%c0_18, %c0_19] : memref<8x128xf32, #tpu.memory_space<vmem>>, vector<8x128xf32>
    tpu.vector_store %arg8[%c0_18, %c0_19], %24 {strides = array<i32>} : memref<8x128xf32, #tpu.memory_space<vmem>>, vector<8x128xf32>,
    return
  }
  func.func @transform_0(%arg0: i32) -> (i32, i32) {
    %c0_i32 = arith.constant 0 : i32
    %c0_i32_0 = arith.constant 0 : i32
    return %arg0, %c0_i32 : i32, i32
  }
  func.func @transform_1(%arg0: i32) -> (i32, i32) {
    %c0_i32 = arith.constant 0 : i32
    %c0_i32_0 = arith.constant 0 : i32
    %c0_i32_1 = arith.constant 0 : i32
    return %c0_i32, %c0_i32_0 : i32, i32
  }
  func.func @transform_2(%arg0: i32) -> (i32, i32) {
    %c0_i32 = arith.constant 0 : i32
    %c0_i32_0 = arith.constant 0 : i32
    %c0_i32_1 = arith.constant 0 : i32
    return %c0_i32, %c0_i32_0 : i32, i32
  }
  func.func @transform_3(%arg0: i32) -> (i32, i32) {
    %c0_i32 = arith.constant 0 : i32
    %c0_i32_0 = arith.constant 0 : i32
    %c0_i32_1 = arith.constant 0 : i32
    return %c0_i32, %c0_i32_0 : i32, i32
  }
  func.func @transform_4(%arg0: i32) -> (i32, i32) {
    %c0_i32 = arith.constant 0 : i32
    %c0_i32_0 = arith.constant 0 : i32
    %c0_i32_1 = arith.constant 0 : i32
    return %c0_i32, %c0_i32_0 : i32, i32
  }
  func.func @transform_5(%arg0: i32) -> (i32, i32) {
    %c0_i32 = arith.constant 0 : i32
    %c0_i32_0 = arith.constant 0 : i32
    %c0_i32_1 = arith.constant 0 : i32
    return %c0_i32, %c0_i32_0 : i32, i32
  }
  func.func @transform_6(%arg0: i32) -> (i32, i32) {
    %c0_i32 = arith.constant 0 : i32
    %c0_i32_0 = arith.constant 0 : i32
    %c0_i32_1 = arith.constant 0 : i32
    return %c0_i32, %c0_i32_0 : i32, i32
  }
  func.func @transform_7(%arg0: i32) -> (i32, i32) {
    %c0_i32 = arith.constant 0 : i32
    %c0_i32_0 = arith.constant 0 : i32
    return %arg0, %c0_i32 : i32, i32
  }
}

module attributes {stable_mosaic.version = 11 : i64} {
  func.func @ffn_kernel(%arg0: i32, %arg1: memref<8x16xf32, #tpu.memory_space<vmem>>, %arg2: memref<16x256xf32, #tpu.memory_space<vmem>>, %arg3: memref<1x256xf32, #tpu.memory_space<vmem>>, %arg4: memref<128x128xf32, #tpu.memory_space<vmem>>, %arg5: memref<1x128xf32, #tpu.memory_space<vmem>>, %arg6: memref<128x128xf32, #tpu.memory_space<vmem>>, %arg7: memref<1x128xf32, #tpu.memory_space<vmem>>, %arg8: memref<8x128xf32, #tpu.memory_space<vmem>>) attributes {dimension_semantics = [#tpu.dimension_semantics<parallel>], iteration_bounds = array<i64: 1>, scalar_prefetch = 0 : i64, scratch_operands = 0 : i64, tpu.core_type = #tpu.core_type<tc>, window_params = [{transform_indices = @transform_0, window_bounds = array<i64: 8, 16>}, {pipeline_mode = #tpu.pipeline_mode<synchronous>, transform_indices = @transform_1, window_bounds = array<i64: 16, 256>}, {pipeline_mode = #tpu.pipeline_mode<synchronous>, transform_indices = @transform_2, window_bounds = array<i64: 1, 256>}, {pipeline_mode = #tpu.pipeline_mode<synchronous>, transform_indices = @transform_3, window_bounds = array<i64: 128, 128>}, {pipeline_mode = #tpu.pipeline_mode<synchronous>, transform_indices = @transform_4, window_bounds = array<i64: 1, 128>}, {pipeline_mode = #tpu.pipeline_mode<synchronous>, transform_indices = @transform_5, window_bounds = array<i64: 128, 128>}, {pipeline_mode = #tpu.pipeline_mode<synchronous>, transform_indices = @transform_6, window_bounds = array<i64: 1, 128>}, {transform_indices = @transform_7, window_bounds = array<i64: 8, 128>}]} {
    %c0 = arith.constant 0 : index
    %c0_0 = arith.constant 0 : index
    %0 = vector.load %arg1[%c0, %c0_0] : memref<8x16xf32, #tpu.memory_space<vmem>>, vector<8x16xf32>
    %c0_1 = arith.constant 0 : index
    %c0_2 = arith.constant 0 : index
    %1 = vector.load %arg2[%c0_1, %c0_2] : memref<16x256xf32, #tpu.memory_space<vmem>>, vector<16x256xf32>
    %cst = arith.constant dense<0.000000e+00> : vector<8x256xf32>
    %2 = tpu.matmul %0, %1, %cst {dimension_numbers = #tpu.dot_dimension_numbers<[1], [0], [0], [1], [0, 0, 1, 1], [], []>} : vector<8x16xf32>, vector<16x256xf32>, vector<8x256xf32> -> vector<8x256xf32>
    %c0_3 = arith.constant 0 : index
    %c0_4 = arith.constant 0 : index
    %3 = vector.load %arg3[%c0_3, %c0_4] : memref<1x256xf32, #tpu.memory_space<vmem>>, vector<1x256xf32>
    %4 = vector.broadcast %3 : vector<1x256xf32> to vector<8x256xf32>
    %5 = arith.addf %2, %4 : vector<8x256xf32>
    %6 = vector.extract_strided_slice %5 {offsets = [0, 0], sizes = [8, 128], strides = [1, 1]} : vector<8x256xf32> to vector<8x128xf32>
    %cst_5 = arith.constant 0.000000e+00 : f32
    %7 = vector.broadcast %cst_5 : f32 to vector<8x128xf32>
    %8 = arith.maximumf %6, %7 : vector<8x128xf32>
    %9 = vector.extract_strided_slice %5 {offsets = [0, 128], sizes = [8, 128], strides = [1, 1]} : vector<8x256xf32> to vector<8x128xf32>
    %c0_6 = arith.constant 0 : index
    %c0_7 = arith.constant 0 : index
    %10 = vector.load %arg4[%c0_6, %c0_7] : memref<128x128xf32, #tpu.memory_space<vmem>>, vector<128x128xf32>
    %cst_8 = arith.constant dense<0.000000e+00> : vector<8x128xf32>
    %11 = tpu.matmul %8, %10, %cst_8 {dimension_numbers = #tpu.dot_dimension_numbers<[1], [0], [0], [1], [0, 0, 1, 1], [], []>} : vector<8x128xf32>, vector<128x128xf32>, vector<8x128xf32> -> vector<8x128xf32>
    %c0_9 = arith.constant 0 : index
    %c0_10 = arith.constant 0 : index
    %12 = vector.load %arg5[%c0_9, %c0_10] : memref<1x128xf32, #tpu.memory_space<vmem>>, vector<1x128xf32>
    %13 = vector.broadcast %12 : vector<1x128xf32> to vector<8x128xf32>
    %14 = arith.addf %11, %13 : vector<8x128xf32>
    %cst_11 = arith.constant 0.000000e+00 : f32
    %15 = vector.broadcast %cst_11 : f32 to vector<8x128xf32>
    %16 = arith.maximumf %14, %15 : vector<8x128xf32>
    %c0_12 = arith.constant 0 : index
    %c0_13 = arith.constant 0 : index
    %17 = vector.load %arg6[%c0_12, %c0_13] : memref<128x128xf32, #tpu.memory_space<vmem>>, vector<128x128xf32>
    %cst_14 = arith.constant dense<0.000000e+00> : vector<8x128xf32>
    %18 = tpu.matmul %16, %17, %cst_14 {dimension_numbers = #tpu.dot_dimension_numbers<[1], [0], [0], [1], [0, 0, 1, 1], [], []>} : vector<8x128xf32>, vector<128x128xf32>, vector<8x128xf32> -> vector<8x128xf32>
    %c0_15 = arith.constant 0 : index
    %c0_16 = arith.constant 0 : index
    %19 = vector.load %arg7[%c0_15, %c0_16] : memref<1x128xf32, #tpu.memory_space<vmem>>, vector<1x128xf32>
    %20 = vector.broadcast %19 : vector<1x128xf32> to vector<8x128xf32>
    %21 = arith.addf %18, %20 : vector<8x128xf32>
    %cst_17 = arith.constant 0.000000e+00 : f32
    %22 = vector.broadcast %cst_17 : f32 to vector<8x128xf32>
    %23 = arith.maximumf %21, %22 : vector<8x128xf32>
    %24 = arith.addf %23, %9 : vector<8x128xf32>
    %c0_18 = arith.constant 0 : index
    %c0_19 = arith.constant 0 : index
    %25 = vector.load %arg8[%c0_18, %c0_19] : memref<8x128xf32, #tpu.memory_space<vmem>>, vector<8x128xf32>
    tpu.vector_store %arg8[%c0_18, %c0_19], %24 {strides = array<i32>} : memref<8x128xf32, #tpu.memory_space<vmem>>, vector<8x128xf32>,
    return
  }
  func.func @transform_0(%arg0: i32) -> (i32, i32) {
    %c0_i32 = arith.constant 0 : i32
    %c0_i32_0 = arith.constant 0 : i32
    return %arg0, %c0_i32 : i32, i32
  }
  func.func @transform_1(%arg0: i32) -> (i32, i32) {
    %c0_i32 = arith.constant 0 : i32
    %c0_i32_0 = arith.constant 0 : i32
    %c0_i32_1 = arith.constant 0 : i32
    return %c0_i32, %c0_i32_0 : i32, i32
  }
  func.func @transform_2(%arg0: i32) -> (i32, i32) {
    %c0_i32 = arith.constant 0 : i32
    %c0_i32_0 = arith.constant 0 : i32
    %c0_i32_1 = arith.constant 0 : i32
    return %c0_i32, %c0_i32_0 : i32, i32
  }
  func.func @transform_3(%arg0: i32) -> (i32, i32) {
    %c0_i32 = arith.constant 0 : i32
    %c0_i32_0 = arith.constant 0 : i32
    %c0_i32_1 = arith.constant 0 : i32
    return %c0_i32, %c0_i32_0 : i32, i32
  }
  func.func @transform_4(%arg0: i32) -> (i32, i32) {
    %c0_i32 = arith.constant 0 : i32
    %c0_i32_0 = arith.constant 0 : i32
    %c0_i32_1 = arith.constant 0 : i32
    return %c0_i32, %c0_i32_0 : i32, i32
  }
  func.func @transform_5(%arg0: i32) -> (i32, i32) {
    %c0_i32 = arith.constant 0 : i32
    %c0_i32_0 = arith.constant 0 : i32
    %c0_i32_1 = arith.constant 0 : i32
    return %c0_i32, %c0_i32_0 : i32, i32
  }
  func.func @transform_6(%arg0: i32) -> (i32, i32) {
    %c0_i32 = arith.constant 0 : i32
    %c0_i32_0 = arith.constant 0 : i32
    %c0_i32_1 = arith.constant 0 : i32
    return %c0_i32, %c0_i32_0 : i32, i32
  }
  func.func @transform_7(%arg0: i32) -> (i32, i32) {
    %c0_i32 = arith.constant 0 : i32
    %c0_i32_0 = arith.constant 0 : i32
    return %arg0, %c0_i32 : i32, i32
  }
}

</mosaic_0001>

<llo_original>
// kernel: tpu_custom_call.1
$region0: #{tpu_custom_call.1}
  #allocation0 [shape = 'u32[]', space=smem, size = 0x4, offset = 0x4, fixed_abs, tag = 'smem constant byte address 0x4 - core index']
  #allocation1 [shape = 'u32[144,128]{1,0:T(1,128)}', space=vmem, size = 0x12000, scoped, tag = 'internal scratch']
  %s0 = inlined_call_operand.hbm [shape: f32[8,16], index: 0, kind: input, shape index: {}]
  %s1 = inlined_call_operand.hbm [shape: f32[16,256], index: 1, kind: input, shape index: {}]
  %s2 = inlined_call_operand.vmem [shape: f32[1,256], index: 2, kind: input, shape index: {}]
  %s3 = inlined_call_operand.hbm [shape: f32[128,128], index: 3, kind: input, shape index: {}]
  %s4 = inlined_call_operand.vmem [shape: f32[1,128], index: 4, kind: input, shape index: {}]
  %s5 = inlined_call_operand.hbm [shape: f32[128,128], index: 5, kind: input, shape index: {}]
  %s6 = inlined_call_operand.vmem [shape: f32[1,128], index: 6, kind: input, shape index: {}]
  %s7 = inlined_call_operand.hbm [shape: f32[8,128], index: 7, kind: output, shape index: {}]
  %s8 = sld [smem:[#allocation0]]
  $region54: #{tpu_custom_call.1} parent=0
    _
  %s10 = ssub.s32 1, %s8
  %s11 = scalar_select 0, %s10, %s8
  $region1: #{tpu_custom_call.1} parent=0
    #allocation2 [shape = 'u8[4096]{0}', space=vmem, size = 0x1000, scoped, tag = 'input window, operand 0, single buffered']
    #allocation3 [shape = 's32[1]{0}', space=sflag, size = 0x4, scoped, tag = 'scoped memory for tpu_custom_call.1']
    #allocation4 [shape = 's32[1]{0}', space=sflag, size = 0x4, scoped, tag = 'scoped memory for tpu_custom_call.1']
    #allocation5 [shape = 'u8[16384]{0}', space=vmem, size = 0x4000, scoped, tag = 'input window, operand 1, single buffered']
    #allocation6 [shape = 's32[1]{0}', space=sflag, size = 0x4, scoped, tag = 'scoped memory for tpu_custom_call.1']
    #allocation7 [shape = 'u8[65536]{0}', space=vmem, size = 0x10000, scoped, tag = 'input window, operand 3, single buffered']
    #allocation8 [shape = 'u8[65536]{0}', space=vmem, size = 0x10000, scoped, tag = 'input window, operand 5, single buffered']
    #allocation9 [shape = 's32[1]{0}', space=sflag, size = 0x4, scoped, tag = 'scoped memory for tpu_custom_call.1']
    #allocation10 [shape = 'u8[4096]{0}', space=vmem, size = 0x1000, scoped, tag = 'output window, operand 0, single buffered']
    %12 = vsyncpa [#allocation3], 0
    %13 = vsyncpa [#allocation6], 0
    %14 = vsyncpa [#allocation9], 0
    %15 = vsyncpa [#allocation4], 0
    // Predicated region
    $region2: #{tpu_custom_call.1} parent=1 // pred_check
      _
    $region3: #{tpu_custom_call.1} parent=1 // pred_check_branch
      %17 = sbr.rel (0) target = $region5
    $region4: #{tpu_custom_call.1} parent=1 // pred_region
      %s19 = ssub.s32 128, 128
      %20 = vsyncadd [#allocation3], %s19
      %s22 = sshll.u32 [#allocation2], 4
      %s23 = int_to_ptr.vmem [resolvable:$true] %s22
      %25 = dma.hbm_to_vmem [thread:$0]  %s0, 128, %s23, [#allocation3]
    $region5: #{tpu_custom_call.1} parent=1 // pred_fallthru
      _
    // Predicated region
    $region6: #{tpu_custom_call.1} parent=1 // pred_check
      _
    $region7: #{tpu_custom_call.1} parent=1 // pred_check_branch
      %27 = sbr.rel (0) target = $region9
    $region8: #{tpu_custom_call.1} parent=1 // pred_region
      %s29 = ssub.s32 512, 512
      %30 = vsyncadd [#allocation6], %s29
      %s31 = sshll.u32 [#allocation5], 4
      %s32 = int_to_ptr.vmem [resolvable:$true] %s31
      %37 = dma.hbm_to_vmem [thread:$0]  %s1, 512, %s32, [#allocation6], 256, 256, 16
    $region9: #{tpu_custom_call.1} parent=1 // pred_fallthru
      _
    // Predicated region
    $region10: #{tpu_custom_call.1} parent=1 // pred_check
      _
    $region11: #{tpu_custom_call.1} parent=1 // pred_check_branch
      %39 = sbr.rel (0) target = $region13
    $region12: #{tpu_custom_call.1} parent=1 // pred_region
      _
    $region13: #{tpu_custom_call.1} parent=1 // pred_fallthru
      _
    // Predicated region
    $region14: #{tpu_custom_call.1} parent=1 // pred_check
      _
    $region15: #{tpu_custom_call.1} parent=1 // pred_check_branch
      %41 = sbr.rel (0) target = $region17
    $region16: #{tpu_custom_call.1} parent=1 // pred_region
      %s43 = ssub.s32 2048, 2048
      %44 = vsyncadd [#allocation6], %s43
      %s45 = sshll.u32 [#allocation7], 4
      %s46 = int_to_ptr.vmem [resolvable:$true] %s45
      %51 = dma.hbm_to_vmem [thread:$0]  %s3, 2048, %s46, [#allocation6], 128, 128, 8
    $region17: #{tpu_custom_call.1} parent=1 // pred_fallthru
      _
    // Predicated region
    $region18: #{tpu_custom_call.1} parent=1 // pred_check
      _
    $region19: #{tpu_custom_call.1} parent=1 // pred_check_branch
      %53 = sbr.rel (0) target = $region21
    $region20: #{tpu_custom_call.1} parent=1 // pred_region
      _
    $region21: #{tpu_custom_call.1} parent=1 // pred_fallthru
      _
    // Predicated region
    $region22: #{tpu_custom_call.1} parent=1 // pred_check
      _
    $region23: #{tpu_custom_call.1} parent=1 // pred_check_branch
      %55 = sbr.rel (0) target = $region25
    $region24: #{tpu_custom_call.1} parent=1 // pred_region
      %s57 = ssub.s32 2048, 2048
      %58 = vsyncadd [#allocation9], %s57
      %s59 = sshll.u32 [#allocation8], 4
      %s60 = int_to_ptr.vmem [resolvable:$true] %s59
      %65 = dma.hbm_to_vmem [thread:$0]  %s5, 2048, %s60, [#allocation9], 128, 128, 8
    $region25: #{tpu_custom_call.1} parent=1 // pred_fallthru
      _
    // Predicated region
    $region26: #{tpu_custom_call.1} parent=1 // pred_check
      _
    $region27: #{tpu_custom_call.1} parent=1 // pred_check_branch
      %67 = sbr.rel (0) target = $region29
    $region28: #{tpu_custom_call.1} parent=1 // pred_region
      _
    $region29: #{tpu_custom_call.1} parent=1 // pred_fallthru
      _
    // Predicated region
    $region30: #{tpu_custom_call.1} parent=1 // pred_check
      _
    $region31: #{tpu_custom_call.1} parent=1 // pred_check_branch
      %69 = sbr.rel (0) target = $region33
    $region32: #{tpu_custom_call.1} parent=1 // pred_region
      %70 = dma.done [#allocation3], 128
    $region33: #{tpu_custom_call.1} parent=1 // pred_fallthru
      _
    // Predicated region
    $region34: #{tpu_custom_call.1} parent=1 // pred_check
      _
    $region35: #{tpu_custom_call.1} parent=1 // pred_check_branch
      %72 = sbr.rel (0) target = $region37
    $region36: #{tpu_custom_call.1} parent=1 // pred_region
      %73 = dma.done [#allocation6], 512
    $region37: #{tpu_custom_call.1} parent=1 // pred_fallthru
      _
    // Predicated region
    $region38: #{tpu_custom_call.1} parent=1 // pred_check
      _
    $region39: #{tpu_custom_call.1} parent=1 // pred_check_branch
      %75 = sbr.rel (0) target = $region41
    $region40: #{tpu_custom_call.1} parent=1 // pred_region
      %76 = dma.done [#allocation6], 2048
    $region41: #{tpu_custom_call.1} parent=1 // pred_fallthru
      _
    // Predicated region
    $region42: #{tpu_custom_call.1} parent=1 // pred_check
      _
    $region43: #{tpu_custom_call.1} parent=1 // pred_check_branch
      %78 = sbr.rel (0) target = $region45
    $region44: #{tpu_custom_call.1} parent=1 // pred_region
      %79 = dma.done [#allocation9], 2048
    $region45: #{tpu_custom_call.1} parent=1 // pred_fallthru
      _
    %v80 = vld [vmem:[#allocation2] sm:$0xff]
    %v81 = vld [vmem:[#allocation5] sm:$0xff]
    %v82 = vld [vmem:[#allocation5 + $0x8] sm:$0xff]
    %v83 = vld [vmem:[#allocation5 + $0x10] sm:$0xff]
    %v84 = vld [vmem:[#allocation5 + $0x18] sm:$0xff]
    %v85 = vld [vmem:[%s2] sm:$0x3]
    %v87 = vlaneseq
    %v88 = vshrl.u32 %v87, 7
    %v89 = vsub.s32 0, %v88
    %v90 = vrot.slane %v85, %v89
    %v91 = vlaneseq
    %v92 = vshrl.u32 %v91, 7
    %v93 = vsub.s32 1, %v92
    %v94 = vrot.slane %v85, %v93
    %vm97 = vcmask 130048
    %v99 = vsel %vm97, %v80, 0
    %101 = vmatprep.subr.mxu0 0.0
    %102 = vmatpush1.msra.mxu0 0.0
    %103 = vmatprep.subr.mxu0 0.0
    %104 = vmatpush1.msra.mxu0 0.0
    %105 = vmatprep.subr.mxu0 0.0
    %106 = vmatpush1.msra.mxu0 0.0
    %107 = vmatprep.subr.mxu0 0.0
    %108 = vmatpush1.msra.mxu0 0.0
    %109 = vmatprep.subr.mxu0 0.0
    %110 = vmatpush1.msra.mxu0 0.0
    %111 = vmatprep.subr.mxu0 0.0
    %112 = vmatpush1.msra.mxu0 0.0
    %113 = vmatprep.subr.mxu0 0.0
    %114 = vmatpush1.msra.mxu0 0.0
    %115 = vmatprep.subr.mxu0 0.0
    %116 = vmatpush1.msra.mxu0 0.0
    %117 = vmatprep.subr.mxu0 0.0
    %118 = vmatpush1.msra.mxu0 0.0
    %119 = vmatprep.subr.mxu0 0.0
    %120 = vmatpush1.msra.mxu0 0.0
    %121 = vmatprep.subr.mxu0 0.0
    %122 = vmatpush1.msra.mxu0 0.0
    %123 = vmatprep.subr.mxu0 0.0
    %124 = vmatpush1.msra.mxu0 0.0
    %125 = vmatprep.subr.mxu0 0.0
    %126 = vmatpush1.msra.mxu0 0.0
    %127 = vmatprep.subr.mxu0 0.0
    %128 = vmatpush1.msra.mxu0 0.0
    %129 = vmatprep.subr.mxu0 %v84
    %130 = vmatpush1.msra.mxu0 %v83
    %131 = vmatprep.subr.mxu0 %v82
    %132 = vmatpush1.msra.mxu0 %v81
    %133 = vmatprep.subr.mxu0 0.0
    %134 = vmatpush2.msra.mxu0 0.0
    %135 = vmatprep.subr.mxu0 0.0
    %136 = vmatpush2.msra.mxu0 0.0
    %137 = vmatprep.subr.mxu0 0.0
    %138 = vmatpush2.msra.mxu0 0.0
    %139 = vmatprep.subr.mxu0 0.0
    %140 = vmatpush2.msra.mxu0 0.0
    %141 = vmatprep.subr.mxu0 0.0
    %142 = vmatpush2.msra.mxu0 0.0
    %143 = vmatprep.subr.mxu0 0.0
    %144 = vmatpush2.msra.mxu0 0.0
    %145 = vmatprep.subr.mxu0 0.0
    %146 = vmatpush2.msra.mxu0 0.0
    %147 = vmatprep.subr.mxu0 0.0
    %148 = vmatpush2.msra.mxu0 0.0
    %149 = vmatprep.subr.mxu0 0.0
    %150 = vmatpush2.msra.mxu0 0.0
    %151 = vmatprep.subr.mxu0 0.0
    %152 = vmatpush2.msra.mxu0 0.0
    %153 = vmatprep.subr.mxu0 0.0
    %154 = vmatpush2.msra.mxu0 0.0
    %155 = vmatprep.subr.mxu0 0.0
    %156 = vmatpush2.msra.mxu0 0.0
    %157 = vmatprep.subr.mxu0 0.0
    %158 = vmatpush2.msra.mxu0 0.0
    %159 = vmatprep.subr.mxu0 0.0
    %160 = vmatpush2.msra.mxu0 0.0
    %161 = vmatprep.subr.mxu0 0.0
    %162 = vmatpush2.msra.mxu0 0.0
    %163 = vmatprep.subr.mxu0 0.0
    %164 = vmatpush2.msra.mxu0 0.0
    %165 = vmatprep.mubr.f32.mxu0 0.0
    %166 = vmatmul.mubr.f32.gmra.mxu0 %v99
    %v167 = vpop.f32.mrf.mxu0
    %v168 = vadd.f32 %v90, %v167
    %v169 = vpop.f32.mrf.mxu0
    %v170 = vadd.f32 %v94, %v169
    %171 = vdwg.mxu0
    %v172 = vmax.f32 %v168, 0.0
    %v173 = vld [vmem:[#allocation7] sm:$0xff]
    %v174 = vld [vmem:[#allocation7 + $0x8] sm:$0xff]
    %v175 = vld [vmem:[#allocation7 + $0x10] sm:$0xff]
    %v176 = vld [vmem:[#allocation7 + $0x18] sm:$0xff]
    %v177 = vld [vmem:[#allocation7 + $0x20] sm:$0xff]
    %v178 = vld [vmem:[#allocation7 + $0x28] sm:$0xff]
    %v179 = vld [vmem:[#allocation7 + $0x30] sm:$0xff]
    %v180 = vld [vmem:[#allocation7 + $0x38] sm:$0xff]
    %v181 = vld [vmem:[#allocation7 + $0x40] sm:$0xff]
    %v182 = vld [vmem:[#allocation7 + $0x48] sm:$0xff]
    %v183 = vld [vmem:[#allocation7 + $0x50] sm:$0xff]
    %v184 = vld [vmem:[#allocation7 + $0x58] sm:$0xff]
    %v185 = vld [vmem:[#allocation7 + $0x60] sm:$0xff]
    %v186 = vld [vmem:[#allocation7 + $0x68] sm:$0xff]
    %v187 = vld [vmem:[#allocation7 + $0x70] sm:$0xff]
    %v188 = vld [vmem:[#allocation7 + $0x78] sm:$0xff]
    %v189 = vld [vmem:[%s4] sm:$0x1]
    %v191 = vlaneseq
    %v192 = vshrl.u32 %v191, 7
    %v193 = vsub.s32 0, %v192
    %v194 = vrot.slane %v189, %v193
    %196 = vmatprep.subr.mxu0 0.0
    %197 = vmatpush1.msra.mxu0 %v188
    %198 = vmatprep.subr.mxu0 0.0
    %199 = vmatpush1.msra.mxu0 %v187
    %200 = vmatprep.subr.mxu0 0.0
    %201 = vmatpush1.msra.mxu0 %v186
    %202 = vmatprep.subr.mxu0 0.0
    %203 = vmatpush1.msra.mxu0 %v185
    %204 = vmatprep.subr.mxu0 0.0
    %205 = vmatpush1.msra.mxu0 %v184
    %206 = vmatprep.subr.mxu0 0.0
    %207 = vmatpush1.msra.mxu0 %v183
    %208 = vmatprep.subr.mxu0 0.0
    %209 = vmatpush1.msra.mxu0 %v182
    %210 = vmatprep.subr.mxu0 0.0
    %211 = vmatpush1.msra.mxu0 %v181
    %212 = vmatprep.subr.mxu0 0.0
    %213 = vmatpush1.msra.mxu0 %v180
    %214 = vmatprep.subr.mxu0 0.0
    %215 = vmatpush1.msra.mxu0 %v179
    %216 = vmatprep.subr.mxu0 0.0
    %217 = vmatpush1.msra.mxu0 %v178
    %218 = vmatprep.subr.mxu0 0.0
    %219 = vmatpush1.msra.mxu0 %v177
    %220 = vmatprep.subr.mxu0 0.0
    %221 = vmatpush1.msra.mxu0 %v176
    %222 = vmatprep.subr.mxu0 0.0
    %223 = vmatpush1.msra.mxu0 %v175
    %224 = vmatprep.subr.mxu0 0.0
    %225 = vmatpush1.msra.mxu0 %v174
    %226 = vmatprep.subr.mxu0 0.0
    %227 = vmatpush1.msra.mxu0 %v173
    %228 = vmatprep.subr.mxu0 0.0
    %229 = vmatpush2.msra.mxu0 0.0
    %230 = vmatprep.subr.mxu0 0.0
    %231 = vmatpush2.msra.mxu0 0.0
    %232 = vmatprep.subr.mxu0 0.0
    %233 = vmatpush2.msra.mxu0 0.0
    %234 = vmatprep.subr.mxu0 0.0
    %235 = vmatpush2.msra.mxu0 0.0
    %236 = vmatprep.subr.mxu0 0.0
    %237 = vmatpush2.msra.mxu0 0.0
    %238 = vmatprep.subr.mxu0 0.0
    %239 = vmatpush2.msra.mxu0 0.0
    %240 = vmatprep.subr.mxu0 0.0
    %241 = vmatpush2.msra.mxu0 0.0
    %242 = vmatprep.subr.mxu0 0.0
    %243 = vmatpush2.msra.mxu0 0.0
    %244 = vmatprep.subr.mxu0 0.0
    %245 = vmatpush2.msra.mxu0 0.0
    %246 = vmatprep.subr.mxu0 0.0
    %247 = vmatpush2.msra.mxu0 0.0
    %248 = vmatprep.subr.mxu0 0.0
    %249 = vmatpush2.msra.mxu0 0.0
    %250 = vmatprep.subr.mxu0 0.0
    %251 = vmatpush2.msra.mxu0 0.0
    %252 = vmatprep.subr.mxu0 0.0
    %253 = vmatpush2.msra.mxu0 0.0
    %254 = vmatprep.subr.mxu0 0.0
    %255 = vmatpush2.msra.mxu0 0.0
    %256 = vmatprep.subr.mxu0 0.0
    %257 = vmatpush2.msra.mxu0 0.0
    %258 = vmatprep.subr.mxu0 0.0
    %259 = vmatpush2.msra.mxu0 0.0
    %260 = vmatprep.mubr.f32.mxu0 0.0
    %261 = vmatmul.mubr.f32.gmra.mxu0 %v172
    %v262 = vpop.f32.mrf.mxu0
    %v263 = vadd.f32 %v194, %v262
    %v264 = vpop.f32.mrf.mxu0
    %265 = vdwg.mxu0
    %v266 = vmax.f32 %v263, 0.0
    %v267 = vld [vmem:[#allocation8] sm:$0xff]
    %v268 = vld [vmem:[#allocation8 + $0x8] sm:$0xff]
    %v269 = vld [vmem:[#allocation8 + $0x10] sm:$0xff]
    %v270 = vld [vmem:[#allocation8 + $0x18] sm:$0xff]
    %v271 = vld [vmem:[#allocation8 + $0x20] sm:$0xff]
    %v272 = vld [vmem:[#allocation8 + $0x28] sm:$0xff]
    %v273 = vld [vmem:[#allocation8 + $0x30] sm:$0xff]
    %v274 = vld [vmem:[#allocation8 + $0x38] sm:$0xff]
    %v275 = vld [vmem:[#allocation8 + $0x40] sm:$0xff]
    %v276 = vld [vmem:[#allocation8 + $0x48] sm:$0xff]
    %v277 = vld [vmem:[#allocation8 + $0x50] sm:$0xff]
    %v278 = vld [vmem:[#allocation8 + $0x58] sm:$0xff]
    %v279 = vld [vmem:[#allocation8 + $0x60] sm:$0xff]
    %v280 = vld [vmem:[#allocation8 + $0x68] sm:$0xff]
    %v281 = vld [vmem:[#allocation8 + $0x70] sm:$0xff]
    %v282 = vld [vmem:[#allocation8 + $0x78] sm:$0xff]
    %v283 = vld [vmem:[%s6] sm:$0x1]
    %v285 = vlaneseq
    %v286 = vshrl.u32 %v285, 7
    %v287 = vsub.s32 0, %v286
    %v288 = vrot.slane %v283, %v287
    %290 = vmatprep.subr.mxu0 0.0
    %291 = vmatpush1.msra.mxu0 %v282
    %292 = vmatprep.subr.mxu0 0.0
    %293 = vmatpush1.msra.mxu0 %v281
    %294 = vmatprep.subr.mxu0 0.0
    %295 = vmatpush1.msra.mxu0 %v280
    %296 = vmatprep.subr.mxu0 0.0
    %297 = vmatpush1.msra.mxu0 %v279
    %298 = vmatprep.subr.mxu0 0.0
    %299 = vmatpush1.msra.mxu0 %v278
    %300 = vmatprep.subr.mxu0 0.0
    %301 = vmatpush1.msra.mxu0 %v277
    %302 = vmatprep.subr.mxu0 0.0
    %303 = vmatpush1.msra.mxu0 %v276
    %304 = vmatprep.subr.mxu0 0.0
    %305 = vmatpush1.msra.mxu0 %v275
    %306 = vmatprep.subr.mxu0 0.0
    %307 = vmatpush1.msra.mxu0 %v274
    %308 = vmatprep.subr.mxu0 0.0
    %309 = vmatpush1.msra.mxu0 %v273
    %310 = vmatprep.subr.mxu0 0.0
    %311 = vmatpush1.msra.mxu0 %v272
    %312 = vmatprep.subr.mxu0 0.0
    %313 = vmatpush1.msra.mxu0 %v271
    %314 = vmatprep.subr.mxu0 0.0
    %315 = vmatpush1.msra.mxu0 %v270
    %316 = vmatprep.subr.mxu0 0.0
    %317 = vmatpush1.msra.mxu0 %v269
    %318 = vmatprep.subr.mxu0 0.0
    %319 = vmatpush1.msra.mxu0 %v268
    %320 = vmatprep.subr.mxu0 0.0
    %321 = vmatpush1.msra.mxu0 %v267
    %322 = vmatprep.subr.mxu0 0.0
    %323 = vmatpush2.msra.mxu0 0.0
    %324 = vmatprep.subr.mxu0 0.0
    %325 = vmatpush2.msra.mxu0 0.0
    %326 = vmatprep.subr.mxu0 0.0
    %327 = vmatpush2.msra.mxu0 0.0
    %328 = vmatprep.subr.mxu0 0.0
    %329 = vmatpush2.msra.mxu0 0.0
    %330 = vmatprep.subr.mxu0 0.0
    %331 = vmatpush2.msra.mxu0 0.0
    %332 = vmatprep.subr.mxu0 0.0
    %333 = vmatpush2.msra.mxu0 0.0
    %334 = vmatprep.subr.mxu0 0.0
    %335 = vmatpush2.msra.mxu0 0.0
    %336 = vmatprep.subr.mxu0 0.0
    %337 = vmatpush2.msra.mxu0 0.0
    %338 = vmatprep.subr.mxu0 0.0
    %339 = vmatpush2.msra.mxu0 0.0
    %340 = vmatprep.subr.mxu0 0.0
    %341 = vmatpush2.msra.mxu0 0.0
    %342 = vmatprep.subr.mxu0 0.0
    %343 = vmatpush2.msra.mxu0 0.0
    %344 = vmatprep.subr.mxu0 0.0
    %345 = vmatpush2.msra.mxu0 0.0
    %346 = vmatprep.subr.mxu0 0.0
    %347 = vmatpush2.msra.mxu0 0.0
    %348 = vmatprep.subr.mxu0 0.0
    %349 = vmatpush2.msra.mxu0 0.0
    %350 = vmatprep.subr.mxu0 0.0
    %351 = vmatpush2.msra.mxu0 0.0
    %352 = vmatprep.subr.mxu0 0.0
    %353 = vmatpush2.msra.mxu0 0.0
    %354 = vmatprep.mubr.f32.mxu0 0.0
    %355 = vmatmul.mubr.f32.gmra.mxu0 %v266
    %v356 = vpop.f32.mrf.mxu0
    %v357 = vadd.f32 %v288, %v356
    %v358 = vpop.f32.mrf.mxu0
    %359 = vdwg.mxu0
    %v360 = vmax.f32 %v357, 0.0
    %v361 = vadd.f32 %v360, %v170
    %362 = vst [vmem:[#allocation10] sm:$0xff] %v361
    // Predicated region
    $region46: #{tpu_custom_call.1} parent=1 // pred_check
      _
    $region47: #{tpu_custom_call.1} parent=1 // pred_check_branch
      %364 = sbr.rel (0) target = $region49
    $region48: #{tpu_custom_call.1} parent=1 // pred_region
      %s366 = ssub.s32 128, 128
      %367 = vsyncadd [#allocation4], %s366
      %s369 = sshll.u32 [#allocation10], 4
      %s370 = int_to_ptr.vmem [resolvable:$true] %s369
      %372 = dma.vmem_to_hbm [thread:$0]  %s370, 128, %s7, [#allocation4]
    $region49: #{tpu_custom_call.1} parent=1 // pred_fallthru
      _
    // Predicated region
    $region50: #{tpu_custom_call.1} parent=1 // pred_check
      _
    $region51: #{tpu_custom_call.1} parent=1 // pred_check_branch
      %374 = sbr.rel (0) target = $region53
    $region52: #{tpu_custom_call.1} parent=1 // pred_region
      %375 = dma.done [#allocation4], 128
    $region53: #{tpu_custom_call.1} parent=1 // pred_fallthru
      _
    %376 = vsyncpa [#allocation3], 1
    %377 = vsyncpa [#allocation6], 1
    %378 = vsyncpa [#allocation9], 1
    %379 = vsyncpa [#allocation4], 1

// kernel: tpu_custom_call.1
$region0: #{tpu_custom_call.1}
  #allocation0 [shape = 'u32[]', space=smem, size = 0x4, offset = 0x4, fixed_abs, tag = 'smem constant byte address 0x4 - core index']
  #allocation1 [shape = 'u32[144,128]{1,0:T(1,128)}', space=vmem, size = 0x12000, scoped, tag = 'internal scratch']
  %s0 = inlined_call_operand.hbm [shape: f32[8,16], index: 0, kind: input, shape index: {}]
  %s1 = inlined_call_operand.hbm [shape: f32[16,256], index: 1, kind: input, shape index: {}]
  %s2 = inlined_call_operand.vmem [shape: f32[1,256], index: 2, kind: input, shape index: {}]
  %s3 = inlined_call_operand.hbm [shape: f32[128,128], index: 3, kind: input, shape index: {}]
  %s4 = inlined_call_operand.vmem [shape: f32[1,128], index: 4, kind: input, shape index: {}]
  %s5 = inlined_call_operand.hbm [shape: f32[128,128], index: 5, kind: input, shape index: {}]
  %s6 = inlined_call_operand.vmem [shape: f32[1,128], index: 6, kind: input, shape index: {}]
  %s7 = inlined_call_operand.hbm [shape: f32[8,128], index: 7, kind: output, shape index: {}]
  %s8 = sld [smem:[#allocation0]]
  $region54: #{tpu_custom_call.1} parent=0
    _
  %s10 = ssub.s32 1, %s8
  %s11 = scalar_select 0, %s10, %s8
  $region1: #{tpu_custom_call.1} parent=0
    #allocation2 [shape = 'u8[4096]{0}', space=vmem, size = 0x1000, scoped, tag = 'input window, operand 0, single buffered']
    #allocation3 [shape = 's32[1]{0}', space=sflag, size = 0x4, scoped, tag = 'scoped memory for tpu_custom_call.1']
    #allocation4 [shape = 's32[1]{0}', space=sflag, size = 0x4, scoped, tag = 'scoped memory for tpu_custom_call.1']
    #allocation5 [shape = 'u8[16384]{0}', space=vmem, size = 0x4000, scoped, tag = 'input window, operand 1, single buffered']
    #allocation6 [shape = 's32[1]{0}', space=sflag, size = 0x4, scoped, tag = 'scoped memory for tpu_custom_call.1']
    #allocation7 [shape = 'u8[65536]{0}', space=vmem, size = 0x10000, scoped, tag = 'input window, operand 3, single buffered']
    #allocation8 [shape = 'u8[65536]{0}', space=vmem, size = 0x10000, scoped, tag = 'input window, operand 5, single buffered']
    #allocation9 [shape = 's32[1]{0}', space=sflag, size = 0x4, scoped, tag = 'scoped memory for tpu_custom_call.1']
    #allocation10 [shape = 'u8[4096]{0}', space=vmem, size = 0x1000, scoped, tag = 'output window, operand 0, single buffered']
    %12 = vsyncpa [#allocation3], 0
    %13 = vsyncpa [#allocation6], 0
    %14 = vsyncpa [#allocation9], 0
    %15 = vsyncpa [#allocation4], 0
    // Predicated region
    $region2: #{tpu_custom_call.1} parent=1 // pred_check
      _
    $region3: #{tpu_custom_call.1} parent=1 // pred_check_branch
      %17 = sbr.rel (0) target = $region5
    $region4: #{tpu_custom_call.1} parent=1 // pred_region
      %s19 = ssub.s32 128, 128
      %20 = vsyncadd [#allocation3], %s19
      %s22 = sshll.u32 [#allocation2], 4
      %s23 = int_to_ptr.vmem [resolvable:$true] %s22
      %25 = dma.hbm_to_vmem [thread:$0]  %s0, 128, %s23, [#allocation3]
    $region5: #{tpu_custom_call.1} parent=1 // pred_fallthru
      _
    // Predicated region
    $region6: #{tpu_custom_call.1} parent=1 // pred_check
      _
    $region7: #{tpu_custom_call.1} parent=1 // pred_check_branch
      %27 = sbr.rel (0) target = $region9
    $region8: #{tpu_custom_call.1} parent=1 // pred_region
      %s29 = ssub.s32 512, 512
      %30 = vsyncadd [#allocation6], %s29
      %s31 = sshll.u32 [#allocation5], 4
      %s32 = int_to_ptr.vmem [resolvable:$true] %s31
      %37 = dma.hbm_to_vmem [thread:$0]  %s1, 512, %s32, [#allocation6], 256, 256, 16
    $region9: #{tpu_custom_call.1} parent=1 // pred_fallthru
      _
    // Predicated region
    $region10: #{tpu_custom_call.1} parent=1 // pred_check
      _
    $region11: #{tpu_custom_call.1} parent=1 // pred_check_branch
      %39 = sbr.rel (0) target = $region13
    $region12: #{tpu_custom_call.1} parent=1 // pred_region
      _
    $region13: #{tpu_custom_call.1} parent=1 // pred_fallthru
      _
    // Predicated region
    $region14: #{tpu_custom_call.1} parent=1 // pred_check
      _
    $region15: #{tpu_custom_call.1} parent=1 // pred_check_branch
      %41 = sbr.rel (0) target = $region17
    $region16: #{tpu_custom_call.1} parent=1 // pred_region
      %s43 = ssub.s32 2048, 2048
      %44 = vsyncadd [#allocation6], %s43
      %s45 = sshll.u32 [#allocation7], 4
      %s46 = int_to_ptr.vmem [resolvable:$true] %s45
      %51 = dma.hbm_to_vmem [thread:$0]  %s3, 2048, %s46, [#allocation6], 128, 128, 8
    $region17: #{tpu_custom_call.1} parent=1 // pred_fallthru
      _
    // Predicated region
    $region18: #{tpu_custom_call.1} parent=1 // pred_check
      _
    $region19: #{tpu_custom_call.1} parent=1 // pred_check_branch
      %53 = sbr.rel (0) target = $region21
    $region20: #{tpu_custom_call.1} parent=1 // pred_region
      _
    $region21: #{tpu_custom_call.1} parent=1 // pred_fallthru
      _
    // Predicated region
    $region22: #{tpu_custom_call.1} parent=1 // pred_check
      _
    $region23: #{tpu_custom_call.1} parent=1 // pred_check_branch
      %55 = sbr.rel (0) target = $region25
    $region24: #{tpu_custom_call.1} parent=1 // pred_region
      %s57 = ssub.s32 2048, 2048
      %58 = vsyncadd [#allocation9], %s57
      %s59 = sshll.u32 [#allocation8], 4
      %s60 = int_to_ptr.vmem [resolvable:$true] %s59
      %65 = dma.hbm_to_vmem [thread:$0]  %s5, 2048, %s60, [#allocation9], 128, 128, 8
    $region25: #{tpu_custom_call.1} parent=1 // pred_fallthru
      _
    // Predicated region
    $region26: #{tpu_custom_call.1} parent=1 // pred_check
      _
    $region27: #{tpu_custom_call.1} parent=1 // pred_check_branch
      %67 = sbr.rel (0) target = $region29
    $region28: #{tpu_custom_call.1} parent=1 // pred_region
      _
    $region29: #{tpu_custom_call.1} parent=1 // pred_fallthru
      _
    // Predicated region
    $region30: #{tpu_custom_call.1} parent=1 // pred_check
      _
    $region31: #{tpu_custom_call.1} parent=1 // pred_check_branch
      %69 = sbr.rel (0) target = $region33
    $region32: #{tpu_custom_call.1} parent=1 // pred_region
      %70 = dma.done [#allocation3], 128
    $region33: #{tpu_custom_call.1} parent=1 // pred_fallthru
      _
    // Predicated region
    $region34: #{tpu_custom_call.1} parent=1 // pred_check
      _
    $region35: #{tpu_custom_call.1} parent=1 // pred_check_branch
      %72 = sbr.rel (0) target = $region37
    $region36: #{tpu_custom_call.1} parent=1 // pred_region
      %73 = dma.done [#allocation6], 512
    $region37: #{tpu_custom_call.1} parent=1 // pred_fallthru
      _
    // Predicated region
    $region38: #{tpu_custom_call.1} parent=1 // pred_check
      _
    $region39: #{tpu_custom_call.1} parent=1 // pred_check_branch
      %75 = sbr.rel (0) target = $region41
    $region40: #{tpu_custom_call.1} parent=1 // pred_region
      %76 = dma.done [#allocation6], 2048
    $region41: #{tpu_custom_call.1} parent=1 // pred_fallthru
      _
    // Predicated region
    $region42: #{tpu_custom_call.1} parent=1 // pred_check
      _
    $region43: #{tpu_custom_call.1} parent=1 // pred_check_branch
      %78 = sbr.rel (0) target = $region45
    $region44: #{tpu_custom_call.1} parent=1 // pred_region
      %79 = dma.done [#allocation9], 2048
    $region45: #{tpu_custom_call.1} parent=1 // pred_fallthru
      _
    %v80 = vld [vmem:[#allocation2] sm:$0xff]
    %v81 = vld [vmem:[#allocation5] sm:$0xff]
    %v82 = vld [vmem:[#allocation5 + $0x8] sm:$0xff]
    %v83 = vld [vmem:[#allocation5 + $0x10] sm:$0xff]
    %v84 = vld [vmem:[#allocation5 + $0x18] sm:$0xff]
    %v85 = vld [vmem:[%s2] sm:$0x3]
    %v87 = vlaneseq
    %v88 = vshrl.u32 %v87, 7
    %v89 = vsub.s32 0, %v88
    %v90 = vrot.slane %v85, %v89
    %v91 = vlaneseq
    %v92 = vshrl.u32 %v91, 7
    %v93 = vsub.s32 1, %v92
    %v94 = vrot.slane %v85, %v93
    %vm97 = vcmask 130048
    %v99 = vsel %vm97, %v80, 0
    %101 = vmatprep.subr.mxu0 0.0
    %102 = vmatpush1.msra.mxu0 0.0
    %103 = vmatprep.subr.mxu0 0.0
    %104 = vmatpush1.msra.mxu0 0.0
    %105 = vmatprep.subr.mxu0 0.0
    %106 = vmatpush1.msra.mxu0 0.0
    %107 = vmatprep.subr.mxu0 0.0
    %108 = vmatpush1.msra.mxu0 0.0
    %109 = vmatprep.subr.mxu0 0.0
    %110 = vmatpush1.msra.mxu0 0.0
    %111 = vmatprep.subr.mxu0 0.0
    %112 = vmatpush1.msra.mxu0 0.0
    %113 = vmatprep.subr.mxu0 0.0
    %114 = vmatpush1.msra.mxu0 0.0
    %115 = vmatprep.subr.mxu0 0.0
    %116 = vmatpush1.msra.mxu0 0.0
    %117 = vmatprep.subr.mxu0 0.0
    %118 = vmatpush1.msra.mxu0 0.0
    %119 = vmatprep.subr.mxu0 0.0
    %120 = vmatpush1.msra.mxu0 0.0
    %121 = vmatprep.subr.mxu0 0.0
    %122 = vmatpush1.msra.mxu0 0.0
    %123 = vmatprep.subr.mxu0 0.0
    %124 = vmatpush1.msra.mxu0 0.0
    %125 = vmatprep.subr.mxu0 0.0
    %126 = vmatpush1.msra.mxu0 0.0
    %127 = vmatprep.subr.mxu0 0.0
    %128 = vmatpush1.msra.mxu0 0.0
    %129 = vmatprep.subr.mxu0 %v84
    %130 = vmatpush1.msra.mxu0 %v83
    %131 = vmatprep.subr.mxu0 %v82
    %132 = vmatpush1.msra.mxu0 %v81
    %133 = vmatprep.subr.mxu0 0.0
    %134 = vmatpush2.msra.mxu0 0.0
    %135 = vmatprep.subr.mxu0 0.0
    %136 = vmatpush2.msra.mxu0 0.0
    %137 = vmatprep.subr.mxu0 0.0
    %138 = vmatpush2.msra.mxu0 0.0
    %139 = vmatprep.subr.mxu0 0.0
    %140 = vmatpush2.msra.mxu0 0.0
    %141 = vmatprep.subr.mxu0 0.0
    %142 = vmatpush2.msra.mxu0 0.0
    %143 = vmatprep.subr.mxu0 0.0
    %144 = vmatpush2.msra.mxu0 0.0
    %145 = vmatprep.subr.mxu0 0.0
    %146 = vmatpush2.msra.mxu0 0.0
    %147 = vmatprep.subr.mxu0 0.0
    %148 = vmatpush2.msra.mxu0 0.0
    %149 = vmatprep.subr.mxu0 0.0
    %150 = vmatpush2.msra.mxu0 0.0
    %151 = vmatprep.subr.mxu0 0.0
    %152 = vmatpush2.msra.mxu0 0.0
    %153 = vmatprep.subr.mxu0 0.0
    %154 = vmatpush2.msra.mxu0 0.0
    %155 = vmatprep.subr.mxu0 0.0
    %156 = vmatpush2.msra.mxu0 0.0
    %157 = vmatprep.subr.mxu0 0.0
    %158 = vmatpush2.msra.mxu0 0.0
    %159 = vmatprep.subr.mxu0 0.0
    %160 = vmatpush2.msra.mxu0 0.0
    %161 = vmatprep.subr.mxu0 0.0
    %162 = vmatpush2.msra.mxu0 0.0
    %163 = vmatprep.subr.mxu0 0.0
    %164 = vmatpush2.msra.mxu0 0.0
    %165 = vmatprep.mubr.f32.mxu0 0.0
    %166 = vmatmul.mubr.f32.gmra.mxu0 %v99
    %v167 = vpop.f32.mrf.mxu0
    %v168 = vadd.f32 %v90, %v167
    %v169 = vpop.f32.mrf.mxu0
    %v170 = vadd.f32 %v94, %v169
    %171 = vdwg.mxu0
    %v172 = vmax.f32 %v168, 0.0
    %v173 = vld [vmem:[#allocation7] sm:$0xff]
    %v174 = vld [vmem:[#allocation7 + $0x8] sm:$0xff]
    %v175 = vld [vmem:[#allocation7 + $0x10] sm:$0xff]
    %v176 = vld [vmem:[#allocation7 + $0x18] sm:$0xff]
    %v177 = vld [vmem:[#allocation7 + $0x20] sm:$0xff]
    %v178 = vld [vmem:[#allocation7 + $0x28] sm:$0xff]
    %v179 = vld [vmem:[#allocation7 + $0x30] sm:$0xff]
    %v180 = vld [vmem:[#allocation7 + $0x38] sm:$0xff]
    %v181 = vld [vmem:[#allocation7 + $0x40] sm:$0xff]
    %v182 = vld [vmem:[#allocation7 + $0x48] sm:$0xff]
    %v183 = vld [vmem:[#allocation7 + $0x50] sm:$0xff]
    %v184 = vld [vmem:[#allocation7 + $0x58] sm:$0xff]
    %v185 = vld [vmem:[#allocation7 + $0x60] sm:$0xff]
    %v186 = vld [vmem:[#allocation7 + $0x68] sm:$0xff]
    %v187 = vld [vmem:[#allocation7 + $0x70] sm:$0xff]
    %v188 = vld [vmem:[#allocation7 + $0x78] sm:$0xff]
    %v189 = vld [vmem:[%s4] sm:$0x1]
    %v191 = vlaneseq
    %v192 = vshrl.u32 %v191, 7
    %v193 = vsub.s32 0, %v192
    %v194 = vrot.slane %v189, %v193
    %196 = vmatprep.subr.mxu0 0.0
    %197 = vmatpush1.msra.mxu0 %v188
    %198 = vmatprep.subr.mxu0 0.0
    %199 = vmatpush1.msra.mxu0 %v187
    %200 = vmatprep.subr.mxu0 0.0
    %201 = vmatpush1.msra.mxu0 %v186
    %202 = vmatprep.subr.mxu0 0.0
    %203 = vmatpush1.msra.mxu0 %v185
    %204 = vmatprep.subr.mxu0 0.0
    %205 = vmatpush1.msra.mxu0 %v184
    %206 = vmatprep.subr.mxu0 0.0
    %207 = vmatpush1.msra.mxu0 %v183
    %208 = vmatprep.subr.mxu0 0.0
    %209 = vmatpush1.msra.mxu0 %v182
    %210 = vmatprep.subr.mxu0 0.0
    %211 = vmatpush1.msra.mxu0 %v181
    %212 = vmatprep.subr.mxu0 0.0
    %213 = vmatpush1.msra.mxu0 %v180
    %214 = vmatprep.subr.mxu0 0.0
    %215 = vmatpush1.msra.mxu0 %v179
    %216 = vmatprep.subr.mxu0 0.0
    %217 = vmatpush1.msra.mxu0 %v178
    %218 = vmatprep.subr.mxu0 0.0
    %219 = vmatpush1.msra.mxu0 %v177
    %220 = vmatprep.subr.mxu0 0.0
    %221 = vmatpush1.msra.mxu0 %v176
    %222 = vmatprep.subr.mxu0 0.0
    %223 = vmatpush1.msra.mxu0 %v175
    %224 = vmatprep.subr.mxu0 0.0
    %225 = vmatpush1.msra.mxu0 %v174
    %226 = vmatprep.subr.mxu0 0.0
    %227 = vmatpush1.msra.mxu0 %v173
    %228 = vmatprep.subr.mxu0 0.0
    %229 = vmatpush2.msra.mxu0 0.0
    %230 = vmatprep.subr.mxu0 0.0
    %231 = vmatpush2.msra.mxu0 0.0
    %232 = vmatprep.subr.mxu0 0.0
    %233 = vmatpush2.msra.mxu0 0.0
    %234 = vmatprep.subr.mxu0 0.0
    %235 = vmatpush2.msra.mxu0 0.0
    %236 = vmatprep.subr.mxu0 0.0
    %237 = vmatpush2.msra.mxu0 0.0
    %238 = vmatprep.subr.mxu0 0.0
    %239 = vmatpush2.msra.mxu0 0.0
    %240 = vmatprep.subr.mxu0 0.0
    %241 = vmatpush2.msra.mxu0 0.0
    %242 = vmatprep.subr.mxu0 0.0
    %243 = vmatpush2.msra.mxu0 0.0
    %244 = vmatprep.subr.mxu0 0.0
    %245 = vmatpush2.msra.mxu0 0.0
    %246 = vmatprep.subr.mxu0 0.0
    %247 = vmatpush2.msra.mxu0 0.0
    %248 = vmatprep.subr.mxu0 0.0
    %249 = vmatpush2.msra.mxu0 0.0
    %250 = vmatprep.subr.mxu0 0.0
    %251 = vmatpush2.msra.mxu0 0.0
    %252 = vmatprep.subr.mxu0 0.0
    %253 = vmatpush2.msra.mxu0 0.0
    %254 = vmatprep.subr.mxu0 0.0
    %255 = vmatpush2.msra.mxu0 0.0
    %256 = vmatprep.subr.mxu0 0.0
    %257 = vmatpush2.msra.mxu0 0.0
    %258 = vmatprep.subr.mxu0 0.0
    %259 = vmatpush2.msra.mxu0 0.0
    %260 = vmatprep.mubr.f32.mxu0 0.0
    %261 = vmatmul.mubr.f32.gmra.mxu0 %v172
    %v262 = vpop.f32.mrf.mxu0
    %v263 = vadd.f32 %v194, %v262
    %v264 = vpop.f32.mrf.mxu0
    %265 = vdwg.mxu0
    %v266 = vmax.f32 %v263, 0.0
    %v267 = vld [vmem:[#allocation8] sm:$0xff]
    %v268 = vld [vmem:[#allocation8 + $0x8] sm:$0xff]
    %v269 = vld [vmem:[#allocation8 + $0x10] sm:$0xff]
    %v270 = vld [vmem:[#allocation8 + $0x18] sm:$0xff]
    %v271 = vld [vmem:[#allocation8 + $0x20] sm:$0xff]
    %v272 = vld [vmem:[#allocation8 + $0x28] sm:$0xff]
    %v273 = vld [vmem:[#allocation8 + $0x30] sm:$0xff]
    %v274 = vld [vmem:[#allocation8 + $0x38] sm:$0xff]
    %v275 = vld [vmem:[#allocation8 + $0x40] sm:$0xff]
    %v276 = vld [vmem:[#allocation8 + $0x48] sm:$0xff]
    %v277 = vld [vmem:[#allocation8 + $0x50] sm:$0xff]
    %v278 = vld [vmem:[#allocation8 + $0x58] sm:$0xff]
    %v279 = vld [vmem:[#allocation8 + $0x60] sm:$0xff]
    %v280 = vld [vmem:[#allocation8 + $0x68] sm:$0xff]
    %v281 = vld [vmem:[#allocation8 + $0x70] sm:$0xff]
    %v282 = vld [vmem:[#allocation8 + $0x78] sm:$0xff]
    %v283 = vld [vmem:[%s6] sm:$0x1]
    %v285 = vlaneseq
    %v286 = vshrl.u32 %v285, 7
    %v287 = vsub.s32 0, %v286
    %v288 = vrot.slane %v283, %v287
    %290 = vmatprep.subr.mxu0 0.0
    %291 = vmatpush1.msra.mxu0 %v282
    %292 = vmatprep.subr.mxu0 0.0
    %293 = vmatpush1.msra.mxu0 %v281
    %294 = vmatprep.subr.mxu0 0.0
    %295 = vmatpush1.msra.mxu0 %v280
    %296 = vmatprep.subr.mxu0 0.0
    %297 = vmatpush1.msra.mxu0 %v279
    %298 = vmatprep.subr.mxu0 0.0
    %299 = vmatpush1.msra.mxu0 %v278
    %300 = vmatprep.subr.mxu0 0.0
    %301 = vmatpush1.msra.mxu0 %v277
    %302 = vmatprep.subr.mxu0 0.0
    %303 = vmatpush1.msra.mxu0 %v276
    %304 = vmatprep.subr.mxu0 0.0
    %305 = vmatpush1.msra.mxu0 %v275
    %306 = vmatprep.subr.mxu0 0.0
    %307 = vmatpush1.msra.mxu0 %v274
    %308 = vmatprep.subr.mxu0 0.0
    %309 = vmatpush1.msra.mxu0 %v273
    %310 = vmatprep.subr.mxu0 0.0
    %311 = vmatpush1.msra.mxu0 %v272
    %312 = vmatprep.subr.mxu0 0.0
    %313 = vmatpush1.msra.mxu0 %v271
    %314 = vmatprep.subr.mxu0 0.0
    %315 = vmatpush1.msra.mxu0 %v270
    %316 = vmatprep.subr.mxu0 0.0
    %317 = vmatpush1.msra.mxu0 %v269
    %318 = vmatprep.subr.mxu0 0.0
    %319 = vmatpush1.msra.mxu0 %v268
    %320 = vmatprep.subr.mxu0 0.0
    %321 = vmatpush1.msra.mxu0 %v267
    %322 = vmatprep.subr.mxu0 0.0
    %323 = vmatpush2.msra.mxu0 0.0
    %324 = vmatprep.subr.mxu0 0.0
    %325 = vmatpush2.msra.mxu0 0.0
    %326 = vmatprep.subr.mxu0 0.0
    %327 = vmatpush2.msra.mxu0 0.0
    %328 = vmatprep.subr.mxu0 0.0
    %329 = vmatpush2.msra.mxu0 0.0
    %330 = vmatprep.subr.mxu0 0.0
    %331 = vmatpush2.msra.mxu0 0.0
    %332 = vmatprep.subr.mxu0 0.0
    %333 = vmatpush2.msra.mxu0 0.0
    %334 = vmatprep.subr.mxu0 0.0
    %335 = vmatpush2.msra.mxu0 0.0
    %336 = vmatprep.subr.mxu0 0.0
    %337 = vmatpush2.msra.mxu0 0.0
    %338 = vmatprep.subr.mxu0 0.0
    %339 = vmatpush2.msra.mxu0 0.0
    %340 = vmatprep.subr.mxu0 0.0
    %341 = vmatpush2.msra.mxu0 0.0
    %342 = vmatprep.subr.mxu0 0.0
    %343 = vmatpush2.msra.mxu0 0.0
    %344 = vmatprep.subr.mxu0 0.0
    %345 = vmatpush2.msra.mxu0 0.0
    %346 = vmatprep.subr.mxu0 0.0
    %347 = vmatpush2.msra.mxu0 0.0
    %348 = vmatprep.subr.mxu0 0.0
    %349 = vmatpush2.msra.mxu0 0.0
    %350 = vmatprep.subr.mxu0 0.0
    %351 = vmatpush2.msra.mxu0 0.0
    %352 = vmatprep.subr.mxu0 0.0
    %353 = vmatpush2.msra.mxu0 0.0
    %354 = vmatprep.mubr.f32.mxu0 0.0
    %355 = vmatmul.mubr.f32.gmra.mxu0 %v266
    %v356 = vpop.f32.mrf.mxu0
    %v357 = vadd.f32 %v288, %v356
    %v358 = vpop.f32.mrf.mxu0
    %359 = vdwg.mxu0
    %v360 = vmax.f32 %v357, 0.0
    %v361 = vadd.f32 %v360, %v170
    %362 = vst [vmem:[#allocation10] sm:$0xff] %v361
    // Predicated region
    $region46: #{tpu_custom_call.1} parent=1 // pred_check
      _
    $region47: #{tpu_custom_call.1} parent=1 // pred_check_branch
      %364 = sbr.rel (0) target = $region49
    $region48: #{tpu_custom_call.1} parent=1 // pred_region
      %s366 = ssub.s32 128, 128
      %367 = vsyncadd [#allocation4], %s366
      %s369 = sshll.u32 [#allocation10], 4
      %s370 = int_to_ptr.vmem [resolvable:$true] %s369
      %372 = dma.vmem_to_hbm [thread:$0]  %s370, 128, %s7, [#allocation4]
    $region49: #{tpu_custom_call.1} parent=1 // pred_fallthru
      _
    // Predicated region
    $region50: #{tpu_custom_call.1} parent=1 // pred_check
      _
    $region51: #{tpu_custom_call.1} parent=1 // pred_check_branch
      %374 = sbr.rel (0) target = $region53
    $region52: #{tpu_custom_call.1} parent=1 // pred_region
      %375 = dma.done [#allocation4], 128
    $region53: #{tpu_custom_call.1} parent=1 // pred_fallthru
      _
    %376 = vsyncpa [#allocation3], 1
    %377 = vsyncpa [#allocation6], 1
    %378 = vsyncpa [#allocation9], 1
    %379 = vsyncpa [#allocation4], 1

</llo_original>
